<compile_context>
chip_gen: v6e
topology: v6e:2x2x1
jax: 0.10.0
libtpu: 0.0.40
codegen_flags: <defaults>
</compile_context>

<pallas_src>
import jax
import jax.numpy as jnp
from jax.experimental import pallas as pl
from jax.experimental.pallas import tpu as pltpu


def ntm_kernel(lhs_ref, w_ref, b_ref, out_ref):
    """Fused NTM forward.

    lhs_ref : (2B, E)  bf16   rows [0:B] = ngram embeddings, [B:2B] = doc embeddings
    w_ref   : (E, 2T)  bf16   cols [0:T] = Wn^T, [T:2T] = Wd^T
    b_ref   : (1, 2T)  f32    [bn ; bd]
    out_ref : (B, 1)   f32    per-row score
    """
    two_b = lhs_ref.shape[0]
    b = two_b // 2
    t = w_ref.shape[1] // 2

    # One 256-wide MXU matmul covers both linear layers; accumulate in f32.
    logits = jnp.dot(lhs_ref[...], w_ref[...],
                     preferred_element_type=jnp.float32) + b_ref[...]   # (2B, 2T) f32

    # Static, tile-aligned slices of the fused logits (f32 tile = (8, 128)).
    ngram_logits = logits[:b, :t]       # ngram rows  x Wn columns  -> (B, T)
    doc_logits = logits[b:, t:]         # doc rows    x Wd columns  -> (B, T)

    # ngram branch: sigmoid (VPU/EUP, f32)
    ngram_topic = jax.nn.sigmoid(ngram_logits)

    # document branch: numerically-stable softmax over the topic (lane) axis
    m = jnp.max(doc_logits, axis=-1, keepdims=True)
    e = jnp.exp(doc_logits - m)
    denom = jnp.sum(e, axis=-1, keepdims=True)
    doc_topic = e * pl.reciprocal(denom, approx=True)   # EUP vrcp, free slot

    # Per-row dot product of the two topic distributions.
    out_ref[...] = jnp.sum(ngram_topic * doc_topic, axis=-1, keepdims=True)  # (B, 1)


def prepare_ntm_params(params):
    """One-time layout prep (do NOT call per forward pass).

    params: (wn (T,E), bn (T,), wd (T,E), bd (T,)) in PyTorch nn.Linear layout.
    Returns (w_cat (E, 2T) bf16, b_cat (1, 2T) f32).
    """
    wn, bn, wd, bd = params
    t = wn.shape[0]
    w_cat = jnp.concatenate([wn.T, wd.T], axis=1).astype(jnp.bfloat16)   # (E, 2T)
    b_cat = jnp.concatenate([bn, bd]).reshape(1, 2 * t).astype(jnp.float32)
    return w_cat, b_cat


@jax.jit
def neural_topic_model(ngram_embedding, document_embedding, w_cat, b_cat):
    """ngram/document embeddings: (B, E). Returns (B,) f32 scores."""
    B, E = ngram_embedding.shape
    T2 = w_cat.shape[1]

    # Stack both batches so the kernel does a single (2B, E) @ (E, 2T) matmul.
    # The concat + bf16 cast fuse under jit; weights are already prepped.
    lhs = jnp.concatenate([ngram_embedding, document_embedding], axis=0)
    lhs = lhs.astype(jnp.bfloat16)                                        # (2B, E)

    full = lambda shape: pl.BlockSpec(shape, lambda: (0,) * len(shape))

    score = pl.pallas_call(
        ntm_kernel,
        out_shape=jax.ShapeDtypeStruct((B, 1), jnp.float32),
        grid=(),                       # whole problem fits one VMEM tile at this size
        in_specs=[
            full((2 * B, E)),          # fused embeddings (bf16)
            full((E, T2)),             # fused [Wn^T | Wd^T] (bf16)
            full((1, T2)),             # fused [bn ; bd] (f32)
        ],
        out_specs=full((B, 1)),
    )(lhs, w_cat, b_cat)

    return score[:, 0]


def reference(ngram_embedding, document_embedding, params):
    wn, bn, wd, bd = params
    ngram_topic = jax.nn.sigmoid(ngram_embedding @ wn.T + bn)
    document_topic = jax.nn.softmax(document_embedding @ wd.T + bd, axis=-1)
    return jnp.sum(ngram_topic * document_topic, axis=-1)


if __name__ == "__main__":
    # Small, TPU-friendly shapes consistent with the module's forward
    # (embedding_dim=E, topic_dim=T).
    B, E, T = 8, 256, 128

    key = jax.random.PRNGKey(0)
    k1, k2, k3, k4, k5, k6 = jax.random.split(key, 6)

    # Synthetic nn.Linear parameters in PyTorch layout: weight (T, E), bias (T,)
    wn = jax.random.normal(k1, (T, E), jnp.float32) * 0.05
    bn = jax.random.normal(k2, (T,), jnp.float32) * 0.05
    wd = jax.random.normal(k3, (T, E), jnp.float32) * 0.05
    bd = jax.random.normal(k4, (T,), jnp.float32) * 0.05
    params = (wn, bn, wd, bd)

    ngram_embedding = jax.random.normal(k5, (B, E), jnp.float32)
    document_embedding = jax.random.normal(k6, (B, E), jnp.float32)

    # One-time parameter layout prep (outside the per-call path).
    w_cat, b_cat = prepare_ntm_params(params)

    score = neural_topic_model(ngram_embedding, document_embedding, w_cat, b_cat)
    score = jax.block_until_ready(score)

    ref = reference(ngram_embedding, document_embedding, params)
    assert score.shape == (B,)
    # Tolerance loosened vs f32 reference because MXU operands are bf16 and the
    # softmax denominator uses the approximate EUP reciprocal.
    assert jnp.allclose(score, ref, atol=3e-2, rtol=3e-2), (score, ref)

    print("KERNEL_OK")
</pallas_src>

<mosaic_0001>
module attributes {stable_mosaic.version = 11 : i64} {
  func.func @ntm_kernel(%arg0: memref<16x256xbf16, #tpu.memory_space<vmem>>, %arg1: memref<256x256xbf16, #tpu.memory_space<vmem>>, %arg2: memref<1x256xf32, #tpu.memory_space<vmem>>, %arg3: memref<8x1xf32, #tpu.memory_space<vmem>>) attributes {dimension_semantics = [], scalar_prefetch = 0 : i64, scratch_operands = 0 : i64, tpu.core_type = #tpu.core_type<tc>} {
    %c0 = arith.constant 0 : index
    %c0_0 = arith.constant 0 : index
    %0 = vector.load %arg0[%c0, %c0_0] : memref<16x256xbf16, #tpu.memory_space<vmem>>, vector<16x256xbf16>
    %c0_1 = arith.constant 0 : index
    %c0_2 = arith.constant 0 : index
    %1 = vector.load %arg1[%c0_1, %c0_2] : memref<256x256xbf16, #tpu.memory_space<vmem>>, vector<256x256xbf16>
    %cst = arith.constant dense<0.000000e+00> : vector<16x256xf32>
    %2 = tpu.matmul %0, %1, %cst {dimension_numbers = #tpu.dot_dimension_numbers<[1], [0], [0], [1], [0, 0, 1, 1], [], []>} : vector<16x256xbf16>, vector<256x256xbf16>, vector<16x256xf32> -> vector<16x256xf32>
    %c0_3 = arith.constant 0 : index
    %c0_4 = arith.constant 0 : index
    %3 = vector.load %arg2[%c0_3, %c0_4] : memref<1x256xf32, #tpu.memory_space<vmem>>, vector<1x256xf32>
    %4 = vector.broadcast %3 : vector<1x256xf32> to vector<16x256xf32>
    %5 = arith.addf %2, %4 : vector<16x256xf32>
    %6 = vector.extract_strided_slice %5 {offsets = [0, 0], sizes = [8, 128], strides = [1, 1]} : vector<16x256xf32> to vector<8x128xf32>
    %7 = vector.extract_strided_slice %5 {offsets = [8, 128], sizes = [8, 128], strides = [1, 1]} : vector<16x256xf32> to vector<8x128xf32>
    %8 = arith.negf %6 : vector<8x128xf32>
    %9 = math.exp %8 : vector<8x128xf32>
    %cst_5 = arith.constant 1.000000e+00 : f32
    %10 = vector.broadcast %cst_5 : f32 to vector<8x128xf32>
    %11 = arith.addf %10, %9 : vector<8x128xf32>
    %12 = arith.divf %10, %11 : vector<8x128xf32>
    %cst_6 = arith.constant dense<0xFF800000> : vector<8xf32>
    %13 = vector.multi_reduction <maximumf>, %7, %cst_6 [1] : vector<8x128xf32> to vector<8xf32>
    %14 = vector.shape_cast %13 : vector<8xf32> to vector<8x1xf32>
    %15 = vector.broadcast %14 : vector<8x1xf32> to vector<8x128xf32>
    %16 = arith.subf %7, %15 : vector<8x128xf32>
    %17 = math.exp %16 : vector<8x128xf32>
    %cst_7 = arith.constant dense<0.000000e+00> : vector<8xf32>
    %18 = vector.multi_reduction <add>, %17, %cst_7 [1] : vector<8x128xf32> to vector<8xf32>
    %19 = vector.shape_cast %18 : vector<8xf32> to vector<8x1xf32>
    %20 = tpu.reciprocal %19 {approx = true} : vector<8x1xf32> -> vector<8x1xf32>
    %21 = vector.broadcast %20 : vector<8x1xf32> to vector<8x128xf32>
    %22 = arith.mulf %17, %21 : vector<8x128xf32>
    %23 = arith.mulf %12, %22 : vector<8x128xf32>
    %cst_8 = arith.constant dense<0.000000e+00> : vector<8xf32>
    %24 = vector.multi_reduction <add>, %23, %cst_8 [1] : vector<8x128xf32> to vector<8xf32>
    %25 = vector.shape_cast %24 : vector<8xf32> to vector<8x1xf32>
    %c0_9 = arith.constant 0 : index
    %c0_10 = arith.constant 0 : index
    %26 = vector.load %arg3[%c0_9, %c0_10] : memref<8x1xf32, #tpu.memory_space<vmem>>, vector<8x1xf32>
    tpu.vector_store %arg3[%c0_9, %c0_10], %25 {strides = array<i32>} : memref<8x1xf32, #tpu.memory_space<vmem>>, vector<8x1xf32>,
    return
  }
}

</mosaic_0001>

<llo_original>
// kernel: neural_topic_model.1
$region0: #{neural_topic_model.1}
  #allocation0 [shape = 'u32[]', space=smem, size = 0x4, offset = 0x4, fixed_abs, tag = 'smem constant byte address 0x4 - core index']
  #allocation1 [shape = 'u32[144,128]{1,0:T(1,128)}', space=vmem, size = 0x12000, scoped, tag = 'internal scratch']
  %s0 = inlined_call_operand.vmem [shape: bf16[16,256], index: 0, kind: input, shape index: {}]
  %s1 = inlined_call_operand.hbm [shape: bf16[256,256], index: 1, kind: input, shape index: {}]
  %s2 = inlined_call_operand.vmem [shape: f32[1,256], index: 2, kind: input, shape index: {}]
  %s3 = inlined_call_operand.vmem [shape: f32[8,1], index: 3, kind: output, shape index: {}]
  %s4 = sld [smem:[#allocation0]]
  $region26: #{neural_topic_model.1} parent=0
    _
  %s6 = ssub.s32 1, %s4
  %s7 = scalar_select 0, %s6, %s4
  $region1: #{neural_topic_model.1} parent=0
    #allocation2 [shape = 'u8[131072]{0}', space=vmem, size = 0x20000, scoped, tag = 'input window, operand 1, single buffered']
    #allocation3 [shape = 's32[1]{0}', space=sflag, size = 0x4, scoped, tag = 'scoped memory for neural_topic_model.1']
    %8 = vsyncpa [#allocation3], 0
    // Predicated region
    $region2: #{neural_topic_model.1} parent=1 // pred_check
      _
    $region3: #{neural_topic_model.1} parent=1 // pred_check_branch
      %10 = sbr.rel (0) target = $region5
    $region4: #{neural_topic_model.1} parent=1 // pred_region
      _
    $region5: #{neural_topic_model.1} parent=1 // pred_fallthru
      _
    // Predicated region
    $region6: #{neural_topic_model.1} parent=1 // pred_check
      _
    $region7: #{neural_topic_model.1} parent=1 // pred_check_branch
      %12 = sbr.rel (0) target = $region9
    $region8: #{neural_topic_model.1} parent=1 // pred_region
      %s14 = ssub.s32 4096, 4096
      %15 = vsyncadd [#allocation3], %s14
      %s16 = sshll.u32 [#allocation2], 4
      %s17 = int_to_ptr.vmem [resolvable:$true] %s16
      %22 = dma.hbm_to_vmem [thread:$0]  %s1, 4096, %s17, [#allocation3], 128, 128, 8
    $region9: #{neural_topic_model.1} parent=1 // pred_fallthru
      _
    // Predicated region
    $region10: #{neural_topic_model.1} parent=1 // pred_check
      _
    $region11: #{neural_topic_model.1} parent=1 // pred_check_branch
      %24 = sbr.rel (0) target = $region13
    $region12: #{neural_topic_model.1} parent=1 // pred_region
      _
    $region13: #{neural_topic_model.1} parent=1 // pred_fallthru
      _
    // Predicated region
    $region14: #{neural_topic_model.1} parent=1 // pred_check
      _
    $region15: #{neural_topic_model.1} parent=1 // pred_check_branch
      %26 = sbr.rel (0) target = $region17
    $region16: #{neural_topic_model.1} parent=1 // pred_region
      %27 = dma.done [#allocation3], 4096
    $region17: #{neural_topic_model.1} parent=1 // pred_fallthru
      _
    %v28 = vld [vmem:[%s0] sm:$0xff]
    %v29 = vld [vmem:[%s0 + $0x8] sm:$0xff]
    %v30 = vld [vmem:[#allocation2] sm:$0xff]
    %v31 = vld [vmem:[#allocation2 + $0x8] sm:$0xff]
    %v32 = vld [vmem:[#allocation2 + $0x10] sm:$0xff]
    %v33 = vld [vmem:[#allocation2 + $0x18] sm:$0xff]
    %v34 = vld [vmem:[#allocation2 + $0x20] sm:$0xff]
    %v35 = vld [vmem:[#allocation2 + $0x28] sm:$0xff]
    %v36 = vld [vmem:[#allocation2 + $0x30] sm:$0xff]
    %v37 = vld [vmem:[#allocation2 + $0x38] sm:$0xff]
    %v38 = vld [vmem:[#allocation2 + $0x40] sm:$0xff]
    %v39 = vld [vmem:[#allocation2 + $0x48] sm:$0xff]
    %v40 = vld [vmem:[#allocation2 + $0x50] sm:$0xff]
    %v41 = vld [vmem:[#allocation2 + $0x58] sm:$0xff]
    %v42 = vld [vmem:[#allocation2 + $0x60] sm:$0xff]
    %v43 = vld [vmem:[#allocation2 + $0x68] sm:$0xff]
    %v44 = vld [vmem:[#allocation2 + $0x70] sm:$0xff]
    %v45 = vld [vmem:[#allocation2 + $0x78] sm:$0xff]
    %v46 = vld [vmem:[#allocation2 + $0x80] sm:$0xff]
    %v47 = vld [vmem:[#allocation2 + $0x88] sm:$0xff]
    %v48 = vld [vmem:[#allocation2 + $0x90] sm:$0xff]
    %v49 = vld [vmem:[#allocation2 + $0x98] sm:$0xff]
    %v50 = vld [vmem:[#allocation2 + $0xa0] sm:$0xff]
    %v51 = vld [vmem:[#allocation2 + $0xa8] sm:$0xff]
    %v52 = vld [vmem:[#allocation2 + $0xb0] sm:$0xff]
    %v53 = vld [vmem:[#allocation2 + $0xb8] sm:$0xff]
    %v54 = vld [vmem:[#allocation2 + $0xc0] sm:$0xff]
    %v55 = vld [vmem:[#allocation2 + $0xc8] sm:$0xff]
    %v56 = vld [vmem:[#allocation2 + $0xd0] sm:$0xff]
    %v57 = vld [vmem:[#allocation2 + $0xd8] sm:$0xff]
    %v58 = vld [vmem:[#allocation2 + $0xe0] sm:$0xff]
    %v59 = vld [vmem:[#allocation2 + $0xe8] sm:$0xff]
    %v60 = vld [vmem:[#allocation2 + $0xf0] sm:$0xff]
    %v61 = vld [vmem:[#allocation2 + $0xf8] sm:$0xff]
    %v62 = vld [vmem:[%s2] sm:$0x3]
    %v64 = vlaneseq
    %v65 = vshrl.u32 %v64, 7
    %v66 = vsub.s32 0, %v65
    %v67 = vrot.slane %v62, %v66
    %v68 = vlaneseq
    %v69 = vshrl.u32 %v68, 7
    %v70 = vsub.s32 1, %v69
    %v71 = vrot.slane %v62, %v70
    %v76 = vunpack.c.l.b16 %v28
    %v77 = vunpack.c.h.b16 %v28
    %v78 = vunpack.c.l.b16 %v29
    %v79 = vunpack.c.h.b16 %v29
    %v80 = vpack.c.b16 %v78, %v76
    %v81 = vpack.c.b16 %v79, %v77
    %v116 = vunpack.c.l.b16 %v30
    %v117 = vunpack.c.h.b16 %v30
    %v118 = vunpack.c.l.b16 %v31
    %v119 = vunpack.c.h.b16 %v31
    %v120 = vunpack.c.l.b16 %v32
    %v121 = vunpack.c.h.b16 %v32
    %v122 = vunpack.c.l.b16 %v33
    %v123 = vunpack.c.h.b16 %v33
    %v124 = vunpack.c.l.b16 %v34
    %v125 = vunpack.c.h.b16 %v34
    %v126 = vunpack.c.l.b16 %v35
    %v127 = vunpack.c.h.b16 %v35
    %v128 = vunpack.c.l.b16 %v36
    %v129 = vunpack.c.h.b16 %v36
    %v130 = vunpack.c.l.b16 %v37
    %v131 = vunpack.c.h.b16 %v37
    %v132 = vunpack.c.l.b16 %v38
    %v133 = vunpack.c.h.b16 %v38
    %v134 = vunpack.c.l.b16 %v39
    %v135 = vunpack.c.h.b16 %v39
    %v136 = vunpack.c.l.b16 %v40
    %v137 = vunpack.c.h.b16 %v40
    %v138 = vunpack.c.l.b16 %v41
    %v139 = vunpack.c.h.b16 %v41
    %v140 = vunpack.c.l.b16 %v42
    %v141 = vunpack.c.h.b16 %v42
    %v142 = vunpack.c.l.b16 %v43
    %v143 = vunpack.c.h.b16 %v43
    %v144 = vunpack.c.l.b16 %v44
    %v145 = vunpack.c.h.b16 %v44
    %v146 = vunpack.c.l.b16 %v45
    %v147 = vunpack.c.h.b16 %v45
    %v148 = vunpack.c.l.b16 %v46
    %v149 = vunpack.c.h.b16 %v46
    %v150 = vunpack.c.l.b16 %v47
    %v151 = vunpack.c.h.b16 %v47
    %v152 = vunpack.c.l.b16 %v48
    %v153 = vunpack.c.h.b16 %v48
    %v154 = vunpack.c.l.b16 %v49
    %v155 = vunpack.c.h.b16 %v49
    %v156 = vunpack.c.l.b16 %v50
    %v157 = vunpack.c.h.b16 %v50
    %v158 = vunpack.c.l.b16 %v51
    %v159 = vunpack.c.h.b16 %v51
    %v160 = vunpack.c.l.b16 %v52
    %v161 = vunpack.c.h.b16 %v52
    %v162 = vunpack.c.l.b16 %v53
    %v163 = vunpack.c.h.b16 %v53
    %v164 = vunpack.c.l.b16 %v54
    %v165 = vunpack.c.h.b16 %v54
    %v166 = vunpack.c.l.b16 %v55
    %v167 = vunpack.c.h.b16 %v55
    %v168 = vunpack.c.l.b16 %v56
    %v169 = vunpack.c.h.b16 %v56
    %v170 = vunpack.c.l.b16 %v57
    %v171 = vunpack.c.h.b16 %v57
    %v172 = vunpack.c.l.b16 %v58
    %v173 = vunpack.c.h.b16 %v58
    %v174 = vunpack.c.l.b16 %v59
    %v175 = vunpack.c.h.b16 %v59
    %v176 = vunpack.c.l.b16 %v60
    %v177 = vunpack.c.h.b16 %v60
    %v178 = vunpack.c.l.b16 %v61
    %v179 = vunpack.c.h.b16 %v61
    %v180 = vpack.c.b16 %v118, %v116
    %v181 = vpack.c.b16 %v119, %v117
    %v182 = vpack.c.b16 %v122, %v120
    %v183 = vpack.c.b16 %v123, %v121
    %v184 = vpack.c.b16 %v126, %v124
    %v185 = vpack.c.b16 %v127, %v125
    %v186 = vpack.c.b16 %v130, %v128
    %v187 = vpack.c.b16 %v131, %v129
    %v188 = vpack.c.b16 %v134, %v132
    %v189 = vpack.c.b16 %v135, %v133
    %v190 = vpack.c.b16 %v138, %v136
    %v191 = vpack.c.b16 %v139, %v137
    %v192 = vpack.c.b16 %v142, %v140
    %v193 = vpack.c.b16 %v143, %v141
    %v194 = vpack.c.b16 %v146, %v144
    %v195 = vpack.c.b16 %v147, %v145
    %v196 = vpack.c.b16 %v150, %v148
    %v197 = vpack.c.b16 %v151, %v149
    %v198 = vpack.c.b16 %v154, %v152
    %v199 = vpack.c.b16 %v155, %v153
    %v200 = vpack.c.b16 %v158, %v156
    %v201 = vpack.c.b16 %v159, %v157
    %v202 = vpack.c.b16 %v162, %v160
    %v203 = vpack.c.b16 %v163, %v161
    %v204 = vpack.c.b16 %v166, %v164
    %v205 = vpack.c.b16 %v167, %v165
    %v206 = vpack.c.b16 %v170, %v168
    %v207 = vpack.c.b16 %v171, %v169
    %v208 = vpack.c.b16 %v174, %v172
    %v209 = vpack.c.b16 %v175, %v173
    %v210 = vpack.c.b16 %v178, %v176
    %v211 = vpack.c.b16 %v179, %v177
    %244 = vmatprep.subr.bf16.mxu0 %v195
    %245 = vmatpush1.bf16.msra.mxu0 %v194
    %246 = vmatprep.subr.bf16.mxu0 %v193
    %247 = vmatpush1.bf16.msra.mxu0 %v192
    %248 = vmatprep.subr.bf16.mxu0 %v191
    %249 = vmatpush1.bf16.msra.mxu0 %v190
    %250 = vmatprep.subr.bf16.mxu0 %v189
    %251 = vmatpush1.bf16.msra.mxu0 %v188
    %252 = vmatprep.subr.bf16.mxu0 %v187
    %253 = vmatpush1.bf16.msra.mxu0 %v186
    %254 = vmatprep.subr.bf16.mxu0 %v185
    %255 = vmatpush1.bf16.msra.mxu0 %v184
    %256 = vmatprep.subr.bf16.mxu0 %v183
    %257 = vmatpush1.bf16.msra.mxu0 %v182
    %258 = vmatprep.subr.bf16.mxu0 %v181
    %259 = vmatpush1.bf16.msra.mxu0 %v180
    %260 = vmatprep.subr.bf16.mxu0 %v211
    %261 = vmatpush2.bf16.msra.mxu0 %v210
    %262 = vmatprep.subr.bf16.mxu0 %v209
    %263 = vmatpush2.bf16.msra.mxu0 %v208
    %264 = vmatprep.subr.bf16.mxu0 %v207
    %265 = vmatpush2.bf16.msra.mxu0 %v206
    %266 = vmatprep.subr.bf16.mxu0 %v205
    %267 = vmatpush2.bf16.msra.mxu0 %v204
    %268 = vmatprep.subr.bf16.mxu0 %v203
    %269 = vmatpush2.bf16.msra.mxu0 %v202
    %270 = vmatprep.subr.bf16.mxu0 %v201
    %271 = vmatpush2.bf16.msra.mxu0 %v200
    %272 = vmatprep.subr.bf16.mxu0 %v199
    %273 = vmatpush2.bf16.msra.mxu0 %v198
    %274 = vmatprep.subr.bf16.mxu0 %v197
    %275 = vmatpush2.bf16.msra.mxu0 %v196
    %276 = vmatprep.mubr.bf16.mxu0 %v81
    %277 = vmatmul.mubr.bf16.gmra.mxu0 %v80
    %v278 = vpop.f32.mrf.mxu0
    %v279 = vadd.f32 %v67, %v278
    %v280 = vpop.f32.mrf.mxu0
    %v281 = vpop.f32.mrf.mxu0
    %v282 = vpop.f32.mrf.mxu0
    %v283 = vadd.f32 %v71, %v282
    %284 = vdwg.mxu0
    %v285 = vxor.u32 %v279, 2147483648
    %v286 = vmul.f32 %v285, 1.442695
    %v287 = vpow.pop %v286
    %v288 = vadd.f32 %v287, 1.0
    %v289 = vrcp.pop %v288
    %v290 = vmul.f32 1.0, %v289
    %291 = vmax.xlane.f32.xlu0 %v283
    %v292 = vpop.xlane.xlu0 %291
    %v293 = vsub.f32 %v283, %v292
    %v294 = vmul.f32 %v293, 1.442695
    %v295 = vpow.pop %v294
    %296 = vadd.xlane.f32.xlu0 %v295
    %v297 = vpop.xlane.xlu0 %296
    %v298 = vrcp.pop %v297
    %v299 = vmul.f32 %v295, %v298
    %v300 = vmul.f32 %v290, %v299
    %301 = vadd.xlane.f32.xlu0 %v300
    %v302 = vpop.xlane.xlu0 %301
    %vm303 = vcmask 7168
    %304 = vst.msk [vmem:[%s3] sm:$0xff] %vm303, %v302
    // Predicated region
    $region18: #{neural_topic_model.1} parent=1 // pred_check
      _
    $region19: #{neural_topic_model.1} parent=1 // pred_check_branch
      %306 = sbr.rel (0) target = $region21
    $region20: #{neural_topic_model.1} parent=1 // pred_region
      _
    $region21: #{neural_topic_model.1} parent=1 // pred_fallthru
      _
    // Predicated region
    $region22: #{neural_topic_model.1} parent=1 // pred_check
      _
    $region23: #{neural_topic_model.1} parent=1 // pred_check_branch
      %308 = sbr.rel (0) target = $region25
    $region24: #{neural_topic_model.1} parent=1 // pred_region
      _
    $region25: #{neural_topic_model.1} parent=1 // pred_fallthru
      _
    %309 = vsyncpa [#allocation3], 1

</llo_original>
